<compile_context>
chip_gen: v7x
topology: tpu7x:2x2x1
jax: 0.10.0
libtpu: 0.0.40
codegen_flags: <defaults>
</compile_context>

<pallas_src>
import jax
import jax.numpy as jnp
from jax.experimental import pallas as pl
from jax.experimental.pallas import tpu as pltpu


def _mean_pool_kernel(h_ref, m_ref, o_ref, msum_ref):
    # h_ref: (tb, ts, th)   m_ref: (tb, 1, ts)   o_ref: (tb, 1, th) f32
    # msum_ref: (tb, 1, 1) f32 scratch (mask count accumulator)
    ss = pl.program_id(2)

    @pl.when(ss == 0)
    def _init():
        o_ref[...] = jnp.zeros_like(o_ref)
        msum_ref[...] = jnp.zeros_like(msum_ref)

    m = m_ref[...]            # (tb, 1, ts), native input dtype (0/1 values)
    h = h_ref[...]            # (tb, ts, th), native input dtype — no f32 upcast

    # Masked sum over S as a batched MXU matmul; accumulate in f32 directly in
    # the resident output block. HIGHEST precision keeps f32 inputs exact.
    o_ref[...] += jnp.einsum(
        "bqs,bsh->bqh",
        m,
        h,
        preferred_element_type=jnp.float32,
        precision=jax.lax.Precision.HIGHEST,
    )
    # Mask-count accumulation on the tiny mask tile only.
    msum_ref[...] += jnp.sum(m.astype(jnp.float32), axis=2, keepdims=True)

    @pl.when(ss == pl.num_programs(2) - 1)
    def _finalize():
        denom = jnp.maximum(msum_ref[...], 1e-9)   # torch.clamp(min=1e-9)
        o_ref[...] = o_ref[...] / denom


def _round_up(x, m):
    return ((x + m - 1) // m) * m


def _block_bytes(tb, ts, th, itemsize):
    """Conservative VMEM footprint of one grid step, incl. layout padding."""
    h_blk = tb * _round_up(ts, 8) * _round_up(th, 128) * itemsize   # hidden tile
    m_blk = tb * _round_up(ts, 128) * 32                            # (tb,1,ts): 1->8 sublanes
    o_blk = tb * _round_up(th, 128) * 32                            # (tb,1,th) f32 accumulator
    msum = tb * 128 * 32                                            # (tb,1,1) f32 scratch
    # Inputs/outputs are double-buffered by the pipeline.
    return 2 * (h_blk + m_blk + o_blk) + msum


def _tile_candidates(n, unit):
    """[n] followed by proper divisors of n that are multiples of `unit`, descending."""
    divs = [d for d in range(unit, n, unit) if n % d == 0]
    return [n] + sorted(divs, reverse=True)


def _vmem_budget_and_limit():
    """Generation-aware (v5e/v6e: 128 MiB, v7x: 64 MiB/TC) block budget + scoped limit."""
    try:
        cap = int(pltpu.get_tpu_info().vmem_capacity_bytes)
    except Exception:
        cap = 64 * 1024 * 1024  # conservative fallback = v7x per-TensorCore VMEM
    budget = min(int(cap * 0.55), 48 * 1024 * 1024)   # what tiles may consume
    limit = min(int(cap * 0.90), 100 * 1024 * 1024)   # explicit scoped-VMEM limit
    return budget, limit


def _pick_tiles(B, S, H, itemsize, budget):
    # Batch tile: largest divisor of B that is <= 8 (keeps blocks small while
    # preserving grid parallelism; never forces tb = B for large ragged B).
    tb = max(d for d in range(1, min(B, 8) + 1) if B % d == 0)

    # th: multiple of 128 dividing H, or full H.  ts: multiple of 128 dividing
    # S, or full S (ts is the mask block's last dim, so it needs 128-alignment).
    th_cands = _tile_candidates(H, 128)
    ts_cands = _tile_candidates(S, 128)

    best = None  # (volume, ts, th)
    for th in th_cands:
        for ts in ts_cands:
            if _block_bytes(tb, ts, th, itemsize) <= budget:
                vol = tb * ts * th
                if best is None or vol > best[0]:
                    best = (vol, ts, th)
                break  # largest fitting ts for this th; try next th
    if best is None:
        # Nothing fits the soft budget (e.g. S has no 128-multiple divisor and
        # is huge): take the smallest legal tiles and rely on the raised
        # vmem_limit_bytes.
        # TODO(synk): ragged/odd S would need a masked cdiv grid over S.
        ts, th = ts_cands[-1], th_cands[-1]
    else:
        _, ts, th = best

    # v7x has 2 TensorCores: make sure at least one "parallel" axis has >= 2
    # steps so the grid can shard (cheap no-op loss on single-TC chips).
    if (B // tb) == 1 and (H // th) == 1 and len(th_cands) > 1:
        th = th_cands[1]
    return tb, ts, th


def mean_pooling(last_hidden_state, attention_mask):
    """last_hidden_state: [B, S, H]; attention_mask: [B, 1, S] -> [B, H] (f32)."""
    B, S, H = last_hidden_state.shape
    assert attention_mask.shape == (B, 1, S)

    # The module casts the mask to float; keep it in the hidden-state dtype so
    # the big tile is never upcast in-kernel (exact for 0/1 masks; a soft mask
    # in bf16 would round slightly — accumulation is still f32 on the MXU).
    mask = attention_mask.astype(last_hidden_state.dtype)

    itemsize = last_hidden_state.dtype.itemsize
    budget, vmem_limit = _vmem_budget_and_limit()
    tb, ts, th = _pick_tiles(B, S, H, itemsize, budget)
    grid = (B // tb, H // th, S // ts)

    bytes_accessed = (
        B * S * H * itemsize                 # hidden states read once
        + B * S * itemsize * grid[1]         # mask re-read per H tile (tiny)
        + B * H * 4                          # f32 output write
    )
    cost = pl.CostEstimate(
        flops=2 * B * S * H + B * S, transcendentals=0, bytes_accessed=bytes_accessed
    )

    out3 = pl.pallas_call(
        _mean_pool_kernel,
        out_shape=jax.ShapeDtypeStruct((B, 1, H), jnp.float32),
        grid_spec=pltpu.PrefetchScalarGridSpec(
            num_scalar_prefetch=0,
            grid=grid,
            in_specs=[
                pl.BlockSpec((tb, ts, th), lambda b, hh, ss: (b, ss, hh)),
                pl.BlockSpec((tb, 1, ts), lambda b, hh, ss: (b, 0, ss)),
            ],
            out_specs=pl.BlockSpec((tb, 1, th), lambda b, hh, ss: (b, 0, hh)),
            scratch_shapes=[pltpu.VMEM((tb, 1, 1), jnp.float32)],
        ),
        compiler_params=pltpu.CompilerParams(
            dimension_semantics=("parallel", "parallel", "arbitrary"),
            vmem_limit_bytes=vmem_limit,
        ),
        cost_estimate=cost,
    )(last_hidden_state, mask)

    return out3[:, 0, :]  # [B, 1, H] -> [B, H] (free outside the kernel)


def _reference(last_hidden_state, attention_mask):
    m = jnp.squeeze(attention_mask, axis=1)[..., None].astype(jnp.float32)
    sum_emb = jnp.sum(last_hidden_state * m, axis=1)
    sum_mask = jnp.maximum(jnp.sum(m, axis=1), 1e-9)
    return sum_emb / sum_mask


if __name__ == "__main__":
    key = jax.random.PRNGKey(0)
    k1, k2 = jax.random.split(key)

    B, S, H = 2, 8, 32
    last_hidden_state = jax.random.normal(k1, (B, S, H), dtype=jnp.float32)
    # Binary attention mask with some padding positions zeroed out.
    attention_mask = (jax.random.uniform(k2, (B, 1, S)) > 0.3).astype(jnp.float32)

    out = mean_pooling(last_hidden_state, attention_mask)
    out = jax.block_until_ready(out)

    ref = _reference(last_hidden_state, attention_mask)
    assert out.shape == (B, H)
    assert jnp.allclose(out, ref, atol=1e-5, rtol=1e-5), "mismatch vs reference"

    print("KERNEL_OK")
</pallas_src>

<mosaic_0001>
module attributes {stable_mosaic.version = 11 : i64} {
  func.func @_mean_pool_kernel(%arg0: i32, %arg1: i32, %arg2: i32, %arg3: memref<2x8x32xf32, #tpu.memory_space<vmem>>, %arg4: memref<2x1x8xf32, #tpu.memory_space<vmem>>, %arg5: memref<2x1x32xf32, #tpu.memory_space<vmem>>, %arg6: memref<2x1x1xf32, #tpu.memory_space<vmem>>) attributes {dimension_semantics = [#tpu.dimension_semantics<parallel>, #tpu.dimension_semantics<parallel>, #tpu.dimension_semantics<arbitrary>], iteration_bounds = array<i64: 1, 1, 1>, scalar_prefetch = 0 : i64, scratch_operands = 1 : i64, tpu.core_type = #tpu.core_type<tc>, window_params = [{transform_indices = @transform_0, window_bounds = array<i64: 2, 8, 32>}, {transform_indices = @transform_1, window_bounds = array<i64: 2, 1, 8>}, {transform_indices = @transform_2, window_bounds = array<i64: 2, 1, 32>}]} {
    %c0_i32 = arith.constant 0 : i32
    %0 = arith.cmpi eq, %arg2, %c0_i32 : i32
    %1 = arith.extui %0 : i1 to i32
    %c0_i32_0 = arith.constant 0 : i32
    %2 = arith.cmpi ne, %1, %c0_i32_0 : i32
    scf.if %2 {
      %cst_21 = arith.constant 0.000000e+00 : f32
      %17 = vector.broadcast %cst_21 : f32 to vector<2x1x32xf32>
      %c0_22 = arith.constant 0 : index
      %c0_23 = arith.constant 0 : index
      %c0_24 = arith.constant 0 : index
      %18 = vector.load %arg5[%c0_22, %c0_23, %c0_24] : memref<2x1x32xf32, #tpu.memory_space<vmem>>, vector<2x1x32xf32>
      tpu.vector_store %arg5[%c0_22, %c0_23, %c0_24], %17 {strides = array<i32>} : memref<2x1x32xf32, #tpu.memory_space<vmem>>, vector<2x1x32xf32>,
      %cst_25 = arith.constant 0.000000e+00 : f32
      %19 = vector.broadcast %cst_25 : f32 to vector<2x1x1xf32>
      %c0_26 = arith.constant 0 : index
      %c0_27 = arith.constant 0 : index
      %c0_28 = arith.constant 0 : index
      %20 = vector.load %arg6[%c0_26, %c0_27, %c0_28] : memref<2x1x1xf32, #tpu.memory_space<vmem>>, vector<2x1x1xf32>
      tpu.vector_store %arg6[%c0_26, %c0_27, %c0_28], %19 {strides = array<i32>} : memref<2x1x1xf32, #tpu.memory_space<vmem>>, vector<2x1x1xf32>,
    } else {
    }
    %c0 = arith.constant 0 : index
    %c0_1 = arith.constant 0 : index
    %c0_2 = arith.constant 0 : index
    %3 = vector.load %arg4[%c0, %c0_1, %c0_2] : memref<2x1x8xf32, #tpu.memory_space<vmem>>, vector<2x1x8xf32>
    %c0_3 = arith.constant 0 : index
    %c0_4 = arith.constant 0 : index
    %c0_5 = arith.constant 0 : index
    %4 = vector.load %arg3[%c0_3, %c0_4, %c0_5] : memref<2x8x32xf32, #tpu.memory_space<vmem>>, vector<2x8x32xf32>
    %c0_6 = arith.constant 0 : index
    %c0_7 = arith.constant 0 : index
    %c0_8 = arith.constant 0 : index
    %5 = vector.load %arg5[%c0_6, %c0_7, %c0_8] : memref<2x1x32xf32, #tpu.memory_space<vmem>>, vector<2x1x32xf32>
    "tpu.trace_start"() <{level = 10 : i32, message = "bqs,bsh->bqh"}> : () -> ()
    %cst = arith.constant dense<0.000000e+00> : vector<2x1x32xf32>
    %6 = tpu.matmul %3, %4, %cst {dimension_numbers = #tpu.dot_dimension_numbers<[2], [1], [1], [2], [0, 0, 0, 1, 1, 2], [0], [0]>, precision = #tpu.contract_precision<fp32>} : vector<2x1x8xf32>, vector<2x8x32xf32>, vector<2x1x32xf32> -> vector<2x1x32xf32>
    "tpu.trace_stop"() : () -> ()
    %7 = arith.addf %5, %6 : vector<2x1x32xf32>
    %c0_9 = arith.constant 0 : index
    %c0_10 = arith.constant 0 : index
    %c0_11 = arith.constant 0 : index
    %8 = vector.load %arg5[%c0_9, %c0_10, %c0_11] : memref<2x1x32xf32, #tpu.memory_space<vmem>>, vector<2x1x32xf32>
    tpu.vector_store %arg5[%c0_9, %c0_10, %c0_11], %7 {strides = array<i32>} : memref<2x1x32xf32, #tpu.memory_space<vmem>>, vector<2x1x32xf32>,
    %c0_12 = arith.constant 0 : index
    %c0_13 = arith.constant 0 : index
    %c0_14 = arith.constant 0 : index
    %9 = vector.load %arg6[%c0_12, %c0_13, %c0_14] : memref<2x1x1xf32, #tpu.memory_space<vmem>>, vector<2x1x1xf32>
    %cst_15 = arith.constant dense<0.000000e+00> : vector<2x1xf32>
    %10 = vector.multi_reduction <add>, %3, %cst_15 [2] : vector<2x1x8xf32> to vector<2x1xf32>
    %11 = vector.shape_cast %10 : vector<2x1xf32> to vector<2x1x1xf32>
    %12 = arith.addf %9, %11 : vector<2x1x1xf32>
    %c0_16 = arith.constant 0 : index
    %c0_17 = arith.constant 0 : index
    %c0_18 = arith.constant 0 : index
    %13 = vector.load %arg6[%c0_16, %c0_17, %c0_18] : memref<2x1x1xf32, #tpu.memory_space<vmem>>, vector<2x1x1xf32>
    tpu.vector_store %arg6[%c0_16, %c0_17, %c0_18], %12 {strides = array<i32>} : memref<2x1x1xf32, #tpu.memory_space<vmem>>, vector<2x1x1xf32>,
    %c0_i32_19 = arith.constant 0 : i32
    %14 = arith.cmpi eq, %arg2, %c0_i32_19 : i32
    %15 = arith.extui %14 : i1 to i32
    %c0_i32_20 = arith.constant 0 : i32
    %16 = arith.cmpi ne, %15, %c0_i32_20 : i32
    scf.if %16 {
      %c0_21 = arith.constant 0 : index
      %c0_22 = arith.constant 0 : index
      %c0_23 = arith.constant 0 : index
      %17 = vector.load %arg6[%c0_21, %c0_22, %c0_23] : memref<2x1x1xf32, #tpu.memory_space<vmem>>, vector<2x1x1xf32>
      %cst_24 = arith.constant 9.99999971E-10 : f32
      %18 = vector.broadcast %cst_24 : f32 to vector<2x1x1xf32>
      %19 = arith.maximumf %17, %18 : vector<2x1x1xf32>
      %c0_25 = arith.constant 0 : index
      %c0_26 = arith.constant 0 : index
      %c0_27 = arith.constant 0 : index
      %20 = vector.load %arg5[%c0_25, %c0_26, %c0_27] : memref<2x1x32xf32, #tpu.memory_space<vmem>>, vector<2x1x32xf32>
      %21 = vector.broadcast %19 : vector<2x1x1xf32> to vector<2x1x32xf32>
      %22 = arith.divf %20, %21 : vector<2x1x32xf32>
      %c0_28 = arith.constant 0 : index
      %c0_29 = arith.constant 0 : index
      %c0_30 = arith.constant 0 : index
      %23 = vector.load %arg5[%c0_28, %c0_29, %c0_30] : memref<2x1x32xf32, #tpu.memory_space<vmem>>, vector<2x1x32xf32>
      tpu.vector_store %arg5[%c0_28, %c0_29, %c0_30], %22 {strides = array<i32>} : memref<2x1x32xf32, #tpu.memory_space<vmem>>, vector<2x1x32xf32>,
    } else {
    }
    return
  }
  func.func @transform_0(%arg0: i32, %arg1: i32, %arg2: i32) -> (i32, i32, i32) {
    %c0_i32 = arith.constant 0 : i32
    return %arg0, %arg2, %arg1 : i32, i32, i32
  }
  func.func @transform_1(%arg0: i32, %arg1: i32, %arg2: i32) -> (i32, i32, i32) {
    %c0_i32 = arith.constant 0 : i32
    %c0_i32_0 = arith.constant 0 : i32
    return %arg0, %c0_i32, %arg2 : i32, i32, i32
  }
  func.func @transform_2(%arg0: i32, %arg1: i32, %arg2: i32) -> (i32, i32, i32) {
    %c0_i32 = arith.constant 0 : i32
    %c0_i32_0 = arith.constant 0 : i32
    return %arg0, %c0_i32, %arg1 : i32, i32, i32
  }
}

</mosaic_0001>

<llo_original>
// kernel: tpu_custom_call.1
$region0: #{tpu_custom_call.1}
  #allocation0 [shape = 'u32[]', space=smem, size = 0x4, offset = 0x4, fixed_abs, tag = 'smem constant byte address 0x4 - core index']
  #allocation1 [shape = 'u32[144,128]{1,0:T(1,128)}', space=vmem, size = 0x12000, scoped, tag = 'internal scratch']
  #allocation2 [shape = 'f32[2,1,1]{2,1,0:T(1,128)}', space=vmem, size = 0x400, scoped, tag = 'scratch operand']
  %s0 = inlined_call_operand.hbm [shape: f32[2,8,32], index: 0, kind: input, shape index: {}]
  %s1 = inlined_call_operand.vmem [shape: f32[2,1,8], index: 1, kind: input, shape index: {}]
  %s2 = inlined_call_operand.hbm [shape: f32[2,1,32], index: 2, kind: output, shape index: {}]
  %s3 = sld [smem:[#allocation0]]
  $region30: #{tpu_custom_call.1} parent=0
    _
  %s5 = ssub.s32 1, %s3
  %s6 = scalar_select 0, %s5, %s3
  $region1: #{tpu_custom_call.1} parent=0
    #allocation3 [shape = 'u8[8192]{0}', space=vmem, size = 0x2000, scoped, tag = 'input window, operand 0, single buffered']
    #allocation4 [shape = 's32[1]{0}', space=sflag, size = 0x4, scoped, tag = 'scoped memory for tpu_custom_call.1']
    #allocation5 [shape = 's32[1]{0}', space=sflag, size = 0x4, scoped, tag = 'scoped memory for tpu_custom_call.1']
    #allocation6 [shape = 'u8[1024]{0}', space=vmem, size = 0x400, scoped, tag = 'output window, operand 0, single buffered']
    %7 = vsyncpa [#allocation4], 0
    %8 = vsyncpa [#allocation5], 0
    // Predicated region
    $region2: #{tpu_custom_call.1} parent=1 // pred_check
      _
    $region3: #{tpu_custom_call.1} parent=1 // pred_check_branch
      %10 = sbr.rel (0) target = $region5
    $region4: #{tpu_custom_call.1} parent=1 // pred_region
      %s12 = ssub.s32 256, 256
      %13 = vsyncadd [#allocation4], %s12
      %s14 = sshll.u32 [#allocation3], 4
      %s15 = int_to_ptr.vmem [resolvable:$true] %s14
      %20 = dma.hbm_to_vmem [thread:$0]  %s0, 256, %s15, [#allocation4], 128, 128, 8
    $region5: #{tpu_custom_call.1} parent=1 // pred_fallthru
      _
    // Predicated region
    $region6: #{tpu_custom_call.1} parent=1 // pred_check
      _
    $region7: #{tpu_custom_call.1} parent=1 // pred_check_branch
      %22 = sbr.rel (0) target = $region9
    $region8: #{tpu_custom_call.1} parent=1 // pred_region
      _
    $region9: #{tpu_custom_call.1} parent=1 // pred_fallthru
      _
    // Predicated region
    $region10: #{tpu_custom_call.1} parent=1 // pred_check
      _
    $region11: #{tpu_custom_call.1} parent=1 // pred_check_branch
      %24 = sbr.rel (0) target = $region13
    $region12: #{tpu_custom_call.1} parent=1 // pred_region
      %25 = dma.done [#allocation4], 256
    $region13: #{tpu_custom_call.1} parent=1 // pred_fallthru
      _
    %p26 = scmp.eq.s32.totalorder 0, 0
    // Predicated region
    $region14: #{tpu_custom_call.1} parent=1 // pred_check
      %p27 = pneg %p26
    $region15: #{tpu_custom_call.1} parent=1 // pred_check_branch
      %29 = sbr.rel (%p27) target = $region17
    $region16: #{tpu_custom_call.1} parent=1 // pred_region
      %vm30 = vcmask 253952
      %31 = vst.msk [vmem:[#allocation6] sm:$0x1] %vm30, 0.0
      %32 = vst.msk [vmem:[#allocation6 + $0x1] sm:$0x1] %vm30, 0.0
      %vm33 = vcmask 0
      %34 = vst.msk [vmem:[#allocation2] sm:$0x1] %vm33, 0.0
      %35 = vst.msk [vmem:[#allocation2 + $0x1] sm:$0x1] %vm33, 0.0
    $region17: #{tpu_custom_call.1} parent=1 // pred_fallthru
      _
    %v36 = vld [vmem:[%s1] sm:$0x1]
    %v37 = vld [vmem:[%s1 + $0x1] sm:$0x1]
    %v38 = vld [vmem:[#allocation3] sm:$0xff]
    %v39 = vld [vmem:[#allocation3 + $0x8] sm:$0xff]
    %v40 = vld [vmem:[#allocation6] sm:$0x1]
    %v41 = vld [vmem:[#allocation6 + $0x1] sm:$0x1]
    %vm42 = vcmask 64512
    %v44 = vsel %vm42, %v36, 0
    %46 = vmatprep.subr.mxu0 0.0
    %v47 = vand.u32 %v38, 4294901760
    %48 = vmatpush1.msra.mxu0 %v47
    %49 = vmatprep.subr.mxu0 0.0
    %50 = vmatpush1.msra.mxu0 0.0
    %51 = vmatprep.subr.mxu0 0.0
    %52 = vmatpush1.msra.mxu0 0.0
    %53 = vmatprep.subr.mxu0 0.0
    %54 = vmatpush1.msra.mxu0 0.0
    %55 = vmatprep.subr.mxu0 0.0
    %56 = vmatpush1.msra.mxu0 0.0
    %57 = vmatprep.subr.mxu0 0.0
    %58 = vmatpush1.msra.mxu0 0.0
    %59 = vmatprep.subr.mxu0 0.0
    %60 = vmatpush1.msra.mxu0 0.0
    %61 = vmatprep.subr.mxu0 0.0
    %62 = vmatpush1.msra.mxu0 0.0
    %63 = vmatprep.subr.mxu0 0.0
    %64 = vmatpush1.msra.mxu0 0.0
    %65 = vmatprep.subr.mxu0 0.0
    %66 = vmatpush1.msra.mxu0 0.0
    %67 = vmatprep.subr.mxu0 0.0
    %68 = vmatpush1.msra.mxu0 0.0
    %69 = vmatprep.subr.mxu0 0.0
    %70 = vmatpush1.msra.mxu0 0.0
    %71 = vmatprep.subr.mxu0 0.0
    %72 = vmatpush1.msra.mxu0 0.0
    %73 = vmatprep.subr.mxu0 0.0
    %74 = vmatpush1.msra.mxu0 0.0
    %75 = vmatprep.subr.mxu0 0.0
    %76 = vmatpush1.msra.mxu0 0.0
    %77 = vmatprep.subr.mxu0 0.0
    %78 = vmatpush1.msra.mxu0 0.0
    %79 = vmatprep.subr.mxu0 0.0
    %80 = vmatpush1.msra.mxu0 0.0
    %81 = vmatprep.subr.mxu0 0.0
    %82 = vmatpush1.msra.mxu0 0.0
    %83 = vmatprep.subr.mxu0 0.0
    %84 = vmatpush1.msra.mxu0 0.0
    %85 = vmatprep.subr.mxu0 0.0
    %86 = vmatpush1.msra.mxu0 0.0
    %87 = vmatprep.subr.mxu0 0.0
    %88 = vmatpush1.msra.mxu0 0.0
    %89 = vmatprep.subr.mxu0 0.0
    %90 = vmatpush1.msra.mxu0 0.0
    %91 = vmatprep.subr.mxu0 0.0
    %92 = vmatpush1.msra.mxu0 0.0
    %93 = vmatprep.subr.mxu0 0.0
    %94 = vmatpush1.msra.mxu0 0.0
    %95 = vmatprep.subr.mxu0 0.0
    %96 = vmatpush1.msra.mxu0 0.0
    %97 = vmatprep.subr.mxu0 0.0
    %98 = vmatpush1.msra.mxu0 0.0
    %99 = vmatprep.subr.mxu0 0.0
    %100 = vmatpush1.msra.mxu0 0.0
    %101 = vmatprep.subr.mxu0 0.0
    %102 = vmatpush1.msra.mxu0 0.0
    %103 = vmatprep.subr.mxu0 0.0
    %104 = vmatpush1.msra.mxu0 0.0
    %105 = vmatprep.subr.mxu0 0.0
    %106 = vmatpush1.msra.mxu0 0.0
    %107 = vmatprep.subr.mxu0 0.0
    %108 = vmatpush1.msra.mxu0 0.0
    %109 = vmatprep.subr.mxu0 0.0
    %110 = vmatpush1.msra.mxu0 0.0
    %111 = vmatprep.mubr.f32.mxu0 0.0
    %v112 = vand.u32 %v44, 4294901760
    %v113 = vsub.f32 %v44, %v112
    %v114 = vand.u32 %v113, 4294901760
    %v115 = vsub.f32 %v113, %v114
    %v116 = vand.u32 %v115, 4294901760
    %117 = vmatmul.mubr.f32.gmra.mrb[0].mxu0 %v116
    %v118 = vpop.f32.mrb[0].mxu0
    %v119 = vadd.f32 0.0, %v118
    %v120 = vpop.f32.mrb[0].mxu0
    %121 = vdwg.mxu0
    %122 = vmatprep.subr.mxu0 0.0
    %v123 = vand.u32 %v38, 4294901760
    %v124 = vsub.f32 %v38, %v123
    %v125 = vand.u32 %v124, 4294901760
    %v126 = vsub.f32 %v124, %v125
    %v127 = vand.u32 %v126, 4294901760
    %128 = vmatpush1.msra.mxu0 %v127
    %129 = vmatprep.subr.mxu0 0.0
    %130 = vmatpush1.msra.mxu0 0.0
    %131 = vmatprep.subr.mxu0 0.0
    %132 = vmatpush1.msra.mxu0 0.0
    %133 = vmatprep.subr.mxu0 0.0
    %134 = vmatpush1.msra.mxu0 0.0
    %135 = vmatprep.subr.mxu0 0.0
    %136 = vmatpush1.msra.mxu0 0.0
    %137 = vmatprep.subr.mxu0 0.0
    %138 = vmatpush1.msra.mxu0 0.0
    %139 = vmatprep.subr.mxu0 0.0
    %140 = vmatpush1.msra.mxu0 0.0
    %141 = vmatprep.subr.mxu0 0.0
    %142 = vmatpush1.msra.mxu0 0.0
    %143 = vmatprep.subr.mxu0 0.0
    %144 = vmatpush1.msra.mxu0 0.0
    %145 = vmatprep.subr.mxu0 0.0
    %146 = vmatpush1.msra.mxu0 0.0
    %147 = vmatprep.subr.mxu0 0.0
    %148 = vmatpush1.msra.mxu0 0.0
    %149 = vmatprep.subr.mxu0 0.0
    %150 = vmatpush1.msra.mxu0 0.0
    %151 = vmatprep.subr.mxu0 0.0
    %152 = vmatpush1.msra.mxu0 0.0
    %153 = vmatprep.subr.mxu0 0.0
    %154 = vmatpush1.msra.mxu0 0.0
    %155 = vmatprep.subr.mxu0 0.0
    %156 = vmatpush1.msra.mxu0 0.0
    %157 = vmatprep.subr.mxu0 0.0
    %158 = vmatpush1.msra.mxu0 0.0
    %159 = vmatprep.subr.mxu0 0.0
    %160 = vmatpush1.msra.mxu0 0.0
    %161 = vmatprep.subr.mxu0 0.0
    %162 = vmatpush1.msra.mxu0 0.0
    %163 = vmatprep.subr.mxu0 0.0
    %164 = vmatpush1.msra.mxu0 0.0
    %165 = vmatprep.subr.mxu0 0.0
    %166 = vmatpush1.msra.mxu0 0.0
    %167 = vmatprep.subr.mxu0 0.0
    %168 = vmatpush1.msra.mxu0 0.0
    %169 = vmatprep.subr.mxu0 0.0
    %170 = vmatpush1.msra.mxu0 0.0
    %171 = vmatprep.subr.mxu0 0.0
    %172 = vmatpush1.msra.mxu0 0.0
    %173 = vmatprep.subr.mxu0 0.0
    %174 = vmatpush1.msra.mxu0 0.0
    %175 = vmatprep.subr.mxu0 0.0
    %176 = vmatpush1.msra.mxu0 0.0
    %177 = vmatprep.subr.mxu0 0.0
    %178 = vmatpush1.msra.mxu0 0.0
    %179 = vmatprep.subr.mxu0 0.0
    %180 = vmatpush1.msra.mxu0 0.0
    %181 = vmatprep.subr.mxu0 0.0
    %182 = vmatpush1.msra.mxu0 0.0
    %183 = vmatprep.subr.mxu0 0.0
    %184 = vmatpush1.msra.mxu0 0.0
    %185 = vmatprep.subr.mxu0 0.0
    %186 = vmatpush1.msra.mxu0 0.0
    %187 = vmatprep.subr.mxu0 0.0
    %188 = vmatpush1.msra.mxu0 0.0
    %189 = vmatprep.subr.mxu0 0.0
    %190 = vmatpush1.msra.mxu0 0.0
    %191 = vmatprep.mubr.f32.mxu0 0.0
    %v192 = vand.u32 %v44, 4294901760
    %193 = vmatmul.mubr.f32.gmra.mrb[0].mxu0 %v192
    %v194 = vpop.f32.mrb[0].mxu0
    %v195 = vadd.f32 %v119, %v194
    %v196 = vpop.f32.mrb[0].mxu0
    %197 = vdwg.mxu0
    %198 = vmatprep.subr.mxu0 0.0
    %v199 = vand.u32 %v38, 4294901760
    %v200 = vsub.f32 %v38, %v199
    %201 = vmatpush1.msra.mxu0 %v200
    %202 = vmatprep.subr.mxu0 0.0
    %203 = vmatpush1.msra.mxu0 0.0
    %204 = vmatprep.subr.mxu0 0.0
    %205 = vmatpush1.msra.mxu0 0.0
    %206 = vmatprep.subr.mxu0 0.0
    %207 = vmatpush1.msra.mxu0 0.0
    %208 = vmatprep.subr.mxu0 0.0
    %209 = vmatpush1.msra.mxu0 0.0
    %210 = vmatprep.subr.mxu0 0.0
    %211 = vmatpush1.msra.mxu0 0.0
    %212 = vmatprep.subr.mxu0 0.0
    %213 = vmatpush1.msra.mxu0 0.0
    %214 = vmatprep.subr.mxu0 0.0
    %215 = vmatpush1.msra.mxu0 0.0
    %216 = vmatprep.subr.mxu0 0.0
    %217 = vmatpush1.msra.mxu0 0.0
    %218 = vmatprep.subr.mxu0 0.0
    %219 = vmatpush1.msra.mxu0 0.0
    %220 = vmatprep.subr.mxu0 0.0
    %221 = vmatpush1.msra.mxu0 0.0
    %222 = vmatprep.subr.mxu0 0.0
    %223 = vmatpush1.msra.mxu0 0.0
    %224 = vmatprep.subr.mxu0 0.0
    %225 = vmatpush1.msra.mxu0 0.0
    %226 = vmatprep.subr.mxu0 0.0
    %227 = vmatpush1.msra.mxu0 0.0
    %228 = vmatprep.subr.mxu0 0.0
    %229 = vmatpush1.msra.mxu0 0.0
    %230 = vmatprep.subr.mxu0 0.0
    %231 = vmatpush1.msra.mxu0 0.0
    %232 = vmatprep.subr.mxu0 0.0
    %233 = vmatpush1.msra.mxu0 0.0
    %234 = vmatprep.subr.mxu0 0.0
    %235 = vmatpush1.msra.mxu0 0.0
    %236 = vmatprep.subr.mxu0 0.0
    %237 = vmatpush1.msra.mxu0 0.0
    %238 = vmatprep.subr.mxu0 0.0
    %239 = vmatpush1.msra.mxu0 0.0
    %240 = vmatprep.subr.mxu0 0.0
    %241 = vmatpush1.msra.mxu0 0.0
    %242 = vmatprep.subr.mxu0 0.0
    %243 = vmatpush1.msra.mxu0 0.0
    %244 = vmatprep.subr.mxu0 0.0
    %245 = vmatpush1.msra.mxu0 0.0
    %246 = vmatprep.subr.mxu0 0.0
    %247 = vmatpush1.msra.mxu0 0.0
    %248 = vmatprep.subr.mxu0 0.0
    %249 = vmatpush1.msra.mxu0 0.0
    %250 = vmatprep.subr.mxu0 0.0
    %251 = vmatpush1.msra.mxu0 0.0
    %252 = vmatprep.subr.mxu0 0.0
    %253 = vmatpush1.msra.mxu0 0.0
    %254 = vmatprep.subr.mxu0 0.0
    %255 = vmatpush1.msra.mxu0 0.0
    %256 = vmatprep.subr.mxu0 0.0
    %257 = vmatpush1.msra.mxu0 0.0
    %258 = vmatprep.subr.mxu0 0.0
    %259 = vmatpush1.msra.mxu0 0.0
    %260 = vmatprep.subr.mxu0 0.0
    %261 = vmatpush1.msra.mxu0 0.0
    %262 = vmatprep.subr.mxu0 0.0
    %263 = vmatpush1.msra.mxu0 0.0
    %264 = vmatprep.mubr.f32.mxu0 0.0
    %v265 = vand.u32 %v44, 4294901760
    %v266 = vsub.f32 %v44, %v265
    %267 = vmatmul.mubr.f32.gmra.mrb[0].mxu0 %v266
    %v268 = vpop.f32.mrb[0].mxu0
    %v269 = vadd.f32 %v195, %v268
    %v270 = vpop.f32.mrb[0].mxu0
    %271 = vdwg.mxu0
    %272 = vmatprep.subr.mxu0 0.0
    %v273 = vand.u32 %v38, 4294901760
    %274 = vmatpush1.msra.mxu0 %v273
    %275 = vmatprep.subr.mxu0 0.0
    %276 = vmatpush1.msra.mxu0 0.0
    %277 = vmatprep.subr.mxu0 0.0
    %278 = vmatpush1.msra.mxu0 0.0
    %279 = vmatprep.subr.mxu0 0.0
    %280 = vmatpush1.msra.mxu0 0.0
    %281 = vmatprep.subr.mxu0 0.0
    %282 = vmatpush1.msra.mxu0 0.0
    %283 = vmatprep.subr.mxu0 0.0
    %284 = vmatpush1.msra.mxu0 0.0
    %285 = vmatprep.subr.mxu0 0.0
    %286 = vmatpush1.msra.mxu0 0.0
    %287 = vmatprep.subr.mxu0 0.0
    %288 = vmatpush1.msra.mxu0 0.0
    %289 = vmatprep.subr.mxu0 0.0
    %290 = vmatpush1.msra.mxu0 0.0
    %291 = vmatprep.subr.mxu0 0.0
    %292 = vmatpush1.msra.mxu0 0.0
    %293 = vmatprep.subr.mxu0 0.0
    %294 = vmatpush1.msra.mxu0 0.0
    %295 = vmatprep.subr.mxu0 0.0
    %296 = vmatpush1.msra.mxu0 0.0
    %297 = vmatprep.subr.mxu0 0.0
    %298 = vmatpush1.msra.mxu0 0.0
    %299 = vmatprep.subr.mxu0 0.0
    %300 = vmatpush1.msra.mxu0 0.0
    %301 = vmatprep.subr.mxu0 0.0
    %302 = vmatpush1.msra.mxu0 0.0
    %303 = vmatprep.subr.mxu0 0.0
    %304 = vmatpush1.msra.mxu0 0.0
    %305 = vmatprep.subr.mxu0 0.0
    %306 = vmatpush1.msra.mxu0 0.0
    %307 = vmatprep.subr.mxu0 0.0
    %308 = vmatpush1.msra.mxu0 0.0
    %309 = vmatprep.subr.mxu0 0.0
    %310 = vmatpush1.msra.mxu0 0.0
    %311 = vmatprep.subr.mxu0 0.0
    %312 = vmatpush1.msra.mxu0 0.0
    %313 = vmatprep.subr.mxu0 0.0
    %314 = vmatpush1.msra.mxu0 0.0
    %315 = vmatprep.subr.mxu0 0.0
    %316 = vmatpush1.msra.mxu0 0.0
    %317 = vmatprep.subr.mxu0 0.0
    %318 = vmatpush1.msra.mxu0 0.0
    %319 = vmatprep.subr.mxu0 0.0
    %320 = vmatpush1.msra.mxu0 0.0
    %321 = vmatprep.subr.mxu0 0.0
    %322 = vmatpush1.msra.mxu0 0.0
    %323 = vmatprep.subr.mxu0 0.0
    %324 = vmatpush1.msra.mxu0 0.0
    %325 = vmatprep.subr.mxu0 0.0
    %326 = vmatpush1.msra.mxu0 0.0
    %327 = vmatprep.subr.mxu0 0.0
    %328 = vmatpush1.msra.mxu0 0.0
    %329 = vmatprep.subr.mxu0 0.0
    %330 = vmatpush1.msra.mxu0 0.0
    %331 = vmatprep.subr.mxu0 0.0
    %332 = vmatpush1.msra.mxu0 0.0
    %333 = vmatprep.subr.mxu0 0.0
    %334 = vmatpush1.msra.mxu0 0.0
    %335 = vmatprep.subr.mxu0 0.0
    %336 = vmatpush1.msra.mxu0 0.0
    %337 = vmatprep.mubr.f32.mxu0 0.0
    %v338 = vand.u32 %v44, 4294901760
    %v339 = vsub.f32 %v44, %v338
    %v340 = vand.u32 %v339, 4294901760
    %341 = vmatmul.mubr.f32.gmra.mrb[0].mxu0 %v340
    %v342 = vpop.f32.mrb[0].mxu0
    %v343 = vadd.f32 %v269, %v342
    %v344 = vpop.f32.mrb[0].mxu0
    %345 = vdwg.mxu0
    %346 = vmatprep.subr.mxu0 0.0
    %v347 = vand.u32 %v38, 4294901760
    %v348 = vsub.f32 %v38, %v347
    %v349 = vand.u32 %v348, 4294901760
    %350 = vmatpush1.msra.mxu0 %v349
    %351 = vmatprep.subr.mxu0 0.0
    %352 = vmatpush1.msra.mxu0 0.0
    %353 = vmatprep.subr.mxu0 0.0
    %354 = vmatpush1.msra.mxu0 0.0
    %355 = vmatprep.subr.mxu0 0.0
    %356 = vmatpush1.msra.mxu0 0.0
    %357 = vmatprep.subr.mxu0 0.0
    %358 = vmatpush1.msra.mxu0 0.0
    %359 = vmatprep.subr.mxu0 0.0
    %360 = vmatpush1.msra.mxu0 0.0
    %361 = vmatprep.subr.mxu0 0.0
    %362 = vmatpush1.msra.mxu0 0.0
    %363 = vmatprep.subr.mxu0 0.0
    %364 = vmatpush1.msra.mxu0 0.0
    %365 = vmatprep.subr.mxu0 0.0
    %366 = vmatpush1.msra.mxu0 0.0
    %367 = vmatprep.subr.mxu0 0.0
    %368 = vmatpush1.msra.mxu0 0.0
    %369 = vmatprep.subr.mxu0 0.0
    %370 = vmatpush1.msra.mxu0 0.0
    %371 = vmatprep.subr.mxu0 0.0
    %372 = vmatpush1.msra.mxu0 0.0
    %373 = vmatprep.subr.mxu0 0.0
    %374 = vmatpush1.msra.mxu0 0.0
    %375 = vmatprep.subr.mxu0 0.0
    %376 = vmatpush1.msra.mxu0 0.0
    %377 = vmatprep.subr.mxu0 0.0
    %378 = vmatpush1.msra.mxu0 0.0
    %379 = vmatprep.subr.mxu0 0.0
    %380 = vmatpush1.msra.mxu0 0.0
    %381 = vmatprep.subr.mxu0 0.0
    %382 = vmatpush1.msra.mxu0 0.0
    %383 = vmatprep.subr.mxu0 0.0
    %384 = vmatpush1.msra.mxu0 0.0
    %385 = vmatprep.subr.mxu0 0.0
    %386 = vmatpush1.msra.mxu0 0.0
    %387 = vmatprep.subr.mxu0 0.0
    %388 = vmatpush1.msra.mxu0 0.0
    %389 = vmatprep.subr.mxu0 0.0
    %390 = vmatpush1.msra.mxu0 0.0
    %391 = vmatprep.subr.mxu0 0.0
    %392 = vmatpush1.msra.mxu0 0.0
    %393 = vmatprep.subr.mxu0 0.0
    %394 = vmatpush1.msra.mxu0 0.0
    %395 = vmatprep.subr.mxu0 0.0
    %396 = vmatpush1.msra.mxu0 0.0
    %397 = vmatprep.subr.mxu0 0.0
    %398 = vmatpush1.msra.mxu0 0.0
    %399 = vmatprep.subr.mxu0 0.0
    %400 = vmatpush1.msra.mxu0 0.0
    %401 = vmatprep.subr.mxu0 0.0
    %402 = vmatpush1.msra.mxu0 0.0
    %403 = vmatprep.subr.mxu0 0.0
    %404 = vmatpush1.msra.mxu0 0.0
    %405 = vmatprep.subr.mxu0 0.0
    %406 = vmatpush1.msra.mxu0 0.0
    %407 = vmatprep.subr.mxu0 0.0
    %408 = vmatpush1.msra.mxu0 0.0
    %409 = vmatprep.subr.mxu0 0.0
    %410 = vmatpush1.msra.mxu0 0.0
    %411 = vmatprep.subr.mxu0 0.0
    %412 = vmatpush1.msra.mxu0 0.0
    %413 = vmatprep.mubr.f32.mxu0 0.0
    %v414 = vand.u32 %v44, 4294901760
    %415 = vmatmul.mubr.f32.gmra.mrb[0].mxu0 %v414
    %v416 = vpop.f32.mrb[0].mxu0
    %v417 = vadd.f32 %v343, %v416
    %v418 = vpop.f32.mrb[0].mxu0
    %419 = vdwg.mxu0
    %420 = vmatprep.subr.mxu0 0.0
    %v421 = vand.u32 %v38, 4294901760
    %422 = vmatpush1.msra.mxu0 %v421
    %423 = vmatprep.subr.mxu0 0.0
    %424 = vmatpush1.msra.mxu0 0.0
    %425 = vmatprep.subr.mxu0 0.0
    %426 = vmatpush1.msra.mxu0 0.0
    %427 = vmatprep.subr.mxu0 0.0
    %428 = vmatpush1.msra.mxu0 0.0
    %429 = vmatprep.subr.mxu0 0.0
    %430 = vmatpush1.msra.mxu0 0.0
    %431 = vmatprep.subr.mxu0 0.0
    %432 = vmatpush1.msra.mxu0 0.0
    %433 = vmatprep.subr.mxu0 0.0
    %434 = vmatpush1.msra.mxu0 0.0
    %435 = vmatprep.subr.mxu0 0.0
    %436 = vmatpush1.msra.mxu0 0.0
    %437 = vmatprep.subr.mxu0 0.0
    %438 = vmatpush1.msra.mxu0 0.0
    %439 = vmatprep.subr.mxu0 0.0
    %440 = vmatpush1.msra.mxu0 0.0
    %441 = vmatprep.subr.mxu0 0.0
    %442 = vmatpush1.msra.mxu0 0.0
    %443 = vmatprep.subr.mxu0 0.0
    %444 = vmatpush1.msra.mxu0 0.0
    %445 = vmatprep.subr.mxu0 0.0
    %446 = vmatpush1.msra.mxu0 0.0
    %447 = vmatprep.subr.mxu0 0.0
    %448 = vmatpush1.msra.mxu0 0.0
    %449 = vmatprep.subr.mxu0 0.0
    %450 = vmatpush1.msra.mxu0 0.0
    %451 = vmatprep.subr.mxu0 0.0
    %452 = vmatpush1.msra.mxu0 0.0
    %453 = vmatprep.subr.mxu0 0.0
    %454 = vmatpush1.msra.mxu0 0.0
    %455 = vmatprep.subr.mxu0 0.0
    %456 = vmatpush1.msra.mxu0 0.0
    %457 = vmatprep.subr.mxu0 0.0
    %458 = vmatpush1.msra.mxu0 0.0
    %459 = vmatprep.subr.mxu0 0.0
    %460 = vmatpush1.msra.mxu0 0.0
    %461 = vmatprep.subr.mxu0 0.0
    %462 = vmatpush1.msra.mxu0 0.0
    %463 = vmatprep.subr.mxu0 0.0
    %464 = vmatpush1.msra.mxu0 0.0
    %465 = vmatprep.subr.mxu0 0.0
    %466 = vmatpush1.msra.mxu0 0.0
    %467 = vmatprep.subr.mxu0 0.0
    %468 = vmatpush1.msra.mxu0 0.0
    %469 = vmatprep.subr.mxu0 0.0
    %470 = vmatpush1.msra.mxu0 0.0
    %471 = vmatprep.subr.mxu0 0.0
    %472 = vmatpush1.msra.mxu0 0.0
    %473 = vmatprep.subr.mxu0 0.0
    %474 = vmatpush1.msra.mxu0 0.0
    %475 = vmatprep.subr.mxu0 0.0
    %476 = vmatpush1.msra.mxu0 0.0
    %477 = vmatprep.subr.mxu0 0.0
    %478 = vmatpush1.msra.mxu0 0.0
    %479 = vmatprep.subr.mxu0 0.0
    %480 = vmatpush1.msra.mxu0 0.0
    %481 = vmatprep.subr.mxu0 0.0
    %482 = vmatpush1.msra.mxu0 0.0
    %483 = vmatprep.subr.mxu0 0.0
    %484 = vmatpush1.msra.mxu0 0.0
    %485 = vmatprep.mubr.f32.mxu0 0.0
    %v486 = vand.u32 %v44, 4294901760
    %487 = vmatmul.mubr.f32.gmra.mrb[0].mxu0 %v486
    %v488 = vpop.f32.mrb[0].mxu0
    %v489 = vadd.f32 %v417, %v488
    %v490 = vpop.f32.mrb[0].mxu0
    %491 = vdwg.mxu0
    %v493 = vsel %vm42, %v37, 0
    %495 = vmatprep.subr.mxu0 0.0
    %v496 = vand.u32 %v39, 4294901760
    %497 = vmatpush1.msra.mxu0 %v496
    %498 = vmatprep.subr.mxu0 0.0
    %499 = vmatpush1.msra.mxu0 0.0
    %500 = vmatprep.subr.mxu0 0.0
    %501 = vmatpush1.msra.mxu0 0.0
    %502 = vmatprep.subr.mxu0 0.0
    %503 = vmatpush1.msra.mxu0 0.0
    %504 = vmatprep.subr.mxu0 0.0
    %505 = vmatpush1.msra.mxu0 0.0
    %506 = vmatprep.subr.mxu0 0.0
    %507 = vmatpush1.msra.mxu0 0.0
    %508 = vmatprep.subr.mxu0 0.0
    %509 = vmatpush1.msra.mxu0 0.0
    %510 = vmatprep.subr.mxu0 0.0
    %511 = vmatpush1.msra.mxu0 0.0
    %512 = vmatprep.subr.mxu0 0.0
    %513 = vmatpush1.msra.mxu0 0.0
    %514 = vmatprep.subr.mxu0 0.0
    %515 = vmatpush1.msra.mxu0 0.0
    %516 = vmatprep.subr.mxu0 0.0
    %517 = vmatpush1.msra.mxu0 0.0
    %518 = vmatprep.subr.mxu0 0.0
    %519 = vmatpush1.msra.mxu0 0.0
    %520 = vmatprep.subr.mxu0 0.0
    %521 = vmatpush1.msra.mxu0 0.0
    %522 = vmatprep.subr.mxu0 0.0
    %523 = vmatpush1.msra.mxu0 0.0
    %524 = vmatprep.subr.mxu0 0.0
    %525 = vmatpush1.msra.mxu0 0.0
    %526 = vmatprep.subr.mxu0 0.0
    %527 = vmatpush1.msra.mxu0 0.0
    %528 = vmatprep.subr.mxu0 0.0
    %529 = vmatpush1.msra.mxu0 0.0
    %530 = vmatprep.subr.mxu0 0.0
    %531 = vmatpush1.msra.mxu0 0.0
    %532 = vmatprep.subr.mxu0 0.0
    %533 = vmatpush1.msra.mxu0 0.0
    %534 = vmatprep.subr.mxu0 0.0
    %535 = vmatpush1.msra.mxu0 0.0
    %536 = vmatprep.subr.mxu0 0.0
    %537 = vmatpush1.msra.mxu0 0.0
    %538 = vmatprep.subr.mxu0 0.0
    %539 = vmatpush1.msra.mxu0 0.0
    %540 = vmatprep.subr.mxu0 0.0
    %541 = vmatpush1.msra.mxu0 0.0
    %542 = vmatprep.subr.mxu0 0.0
    %543 = vmatpush1.msra.mxu0 0.0
    %544 = vmatprep.subr.mxu0 0.0
    %545 = vmatpush1.msra.mxu0 0.0
    %546 = vmatprep.subr.mxu0 0.0
    %547 = vmatpush1.msra.mxu0 0.0
    %548 = vmatprep.subr.mxu0 0.0
    %549 = vmatpush1.msra.mxu0 0.0
    %550 = vmatprep.subr.mxu0 0.0
    %551 = vmatpush1.msra.mxu0 0.0
    %552 = vmatprep.subr.mxu0 0.0
    %553 = vmatpush1.msra.mxu0 0.0
    %554 = vmatprep.subr.mxu0 0.0
    %555 = vmatpush1.msra.mxu0 0.0
    %556 = vmatprep.subr.mxu0 0.0
    %557 = vmatpush1.msra.mxu0 0.0
    %558 = vmatprep.subr.mxu0 0.0
    %559 = vmatpush1.msra.mxu0 0.0
    %560 = vmatprep.mubr.f32.mxu0 0.0
    %v561 = vand.u32 %v493, 4294901760
    %v562 = vsub.f32 %v493, %v561
    %v563 = vand.u32 %v562, 4294901760
    %v564 = vsub.f32 %v562, %v563
    %v565 = vand.u32 %v564, 4294901760
    %566 = vmatmul.mubr.f32.gmra.mrb[0].mxu0 %v565
    %v567 = vpop.f32.mrb[0].mxu0
    %v568 = vadd.f32 0.0, %v567
    %v569 = vpop.f32.mrb[0].mxu0
    %570 = vdwg.mxu0
    %571 = vmatprep.subr.mxu0 0.0
    %v572 = vand.u32 %v39, 4294901760
    %v573 = vsub.f32 %v39, %v572
    %v574 = vand.u32 %v573, 4294901760
    %v575 = vsub.f32 %v573, %v574
    %v576 = vand.u32 %v575, 4294901760
    %577 = vmatpush1.msra.mxu0 %v576
    %578 = vmatprep.subr.mxu0 0.0
    %579 = vmatpush1.msra.mxu0 0.0
    %580 = vmatprep.subr.mxu0 0.0
    %581 = vmatpush1.msra.mxu0 0.0
    %582 = vmatprep.subr.mxu0 0.0
    %583 = vmatpush1.msra.mxu0 0.0
    %584 = vmatprep.subr.mxu0 0.0
    %585 = vmatpush1.msra.mxu0 0.0
    %586 = vmatprep.subr.mxu0 0.0
    %587 = vmatpush1.msra.mxu0 0.0
    %588 = vmatprep.subr.mxu0 0.0
    %589 = vmatpush1.msra.mxu0 0.0
    %590 = vmatprep.subr.mxu0 0.0
    %591 = vmatpush1.msra.mxu0 0.0
    %592 = vmatprep.subr.mxu0 0.0
    %593 = vmatpush1.msra.mxu0 0.0
    %594 = vmatprep.subr.mxu0 0.0
    %595 = vmatpush1.msra.mxu0 0.0
    %596 = vmatprep.subr.mxu0 0.0
    %597 = vmatpush1.msra.mxu0 0.0
    %598 = vmatprep.subr.mxu0 0.0
    %599 = vmatpush1.msra.mxu0 0.0
    %600 = vmatprep.subr.mxu0 0.0
    %601 = vmatpush1.msra.mxu0 0.0
    %602 = vmatprep.subr.mxu0 0.0
    %603 = vmatpush1.msra.mxu0 0.0
    %604 = vmatprep.subr.mxu0 0.0
    %605 = vmatpush1.msra.mxu0 0.0
    %606 = vmatprep.subr.mxu0 0.0
    %607 = vmatpush1.msra.mxu0 0.0
    %608 = vmatprep.subr.mxu0 0.0
    %609 = vmatpush1.msra.mxu0 0.0
    %610 = vmatprep.subr.mxu0 0.0
    %611 = vmatpush1.msra.mxu0 0.0
    %612 = vmatprep.subr.mxu0 0.0
    %613 = vmatpush1.msra.mxu0 0.0
    %614 = vmatprep.subr.mxu0 0.0
    %615 = vmatpush1.msra.mxu0 0.0
    %616 = vmatprep.subr.mxu0 0.0
    %617 = vmatpush1.msra.mxu0 0.0
    %618 = vmatprep.subr.mxu0 0.0
    %619 = vmatpush1.msra.mxu0 0.0
    %620 = vmatprep.subr.mxu0 0.0
    %621 = vmatpush1.msra.mxu0 0.0
    %622 = vmatprep.subr.mxu0 0.0
    %623 = vmatpush1.msra.mxu0 0.0
    %624 = vmatprep.subr.mxu0 0.0
    %625 = vmatpush1.msra.mxu0 0.0
    %626 = vmatprep.subr.mxu0 0.0
    %627 = vmatpush1.msra.mxu0 0.0
    %628 = vmatprep.subr.mxu0 0.0
    %629 = vmatpush1.msra.mxu0 0.0
    %630 = vmatprep.subr.mxu0 0.0
    %631 = vmatpush1.msra.mxu0 0.0
    %632 = vmatprep.subr.mxu0 0.0
    %633 = vmatpush1.msra.mxu0 0.0
    %634 = vmatprep.subr.mxu0 0.0
    %635 = vmatpush1.msra.mxu0 0.0
    %636 = vmatprep.subr.mxu0 0.0
    %637 = vmatpush1.msra.mxu0 0.0
    %638 = vmatprep.subr.mxu0 0.0
    %639 = vmatpush1.msra.mxu0 0.0
    %640 = vmatprep.mubr.f32.mxu0 0.0
    %v641 = vand.u32 %v493, 4294901760
    %642 = vmatmul.mubr.f32.gmra.mrb[0].mxu0 %v641
    %v643 = vpop.f32.mrb[0].mxu0
    %v644 = vadd.f32 %v568, %v643
    %v645 = vpop.f32.mrb[0].mxu0
    %646 = vdwg.mxu0
    %647 = vmatprep.subr.mxu0 0.0
    %v648 = vand.u32 %v39, 4294901760
    %v649 = vsub.f32 %v39, %v648
    %650 = vmatpush1.msra.mxu0 %v649
    %651 = vmatprep.subr.mxu0 0.0
    %652 = vmatpush1.msra.mxu0 0.0
    %653 = vmatprep.subr.mxu0 0.0
    %654 = vmatpush1.msra.mxu0 0.0
    %655 = vmatprep.subr.mxu0 0.0
    %656 = vmatpush1.msra.mxu0 0.0
    %657 = vmatprep.subr.mxu0 0.0
    %658 = vmatpush1.msra.mxu0 0.0
    %659 = vmatprep.subr.mxu0 0.0
    %660 = vmatpush1.msra.mxu0 0.0
    %661 = vmatprep.subr.mxu0 0.0
    %662 = vmatpush1.msra.mxu0 0.0
    %663 = vmatprep.subr.mxu0 0.0
    %664 = vmatpush1.msra.mxu0 0.0
    %665 = vmatprep.subr.mxu0 0.0
    %666 = vmatpush1.msra.mxu0 0.0
    %667 = vmatprep.subr.mxu0 0.0
    %668 = vmatpush1.msra.mxu0 0.0
    %669 = vmatprep.subr.mxu0 0.0
    %670 = vmatpush1.msra.mxu0 0.0
    %671 = vmatprep.subr.mxu0 0.0
    %672 = vmatpush1.msra.mxu0 0.0
    %673 = vmatprep.subr.mxu0 0.0
    %674 = vmatpush1.msra.mxu0 0.0
    %675 = vmatprep.subr.mxu0 0.0
    %676 = vmatpush1.msra.mxu0 0.0
    %677 = vmatprep.subr.mxu0 0.0
    %678 = vmatpush1.msra.mxu0 0.0
    %679 = vmatprep.subr.mxu0 0.0
    %680 = vmatpush1.msra.mxu0 0.0
    %681 = vmatprep.subr.mxu0 0.0
    %682 = vmatpush1.msra.mxu0 0.0
    %683 = vmatprep.subr.mxu0 0.0
    %684 = vmatpush1.msra.mxu0 0.0
    %685 = vmatprep.subr.mxu0 0.0
    %686 = vmatpush1.msra.mxu0 0.0
    %687 = vmatprep.subr.mxu0 0.0
    %688 = vmatpush1.msra.mxu0 0.0
    %689 = vmatprep.subr.mxu0 0.0
    %690 = vmatpush1.msra.mxu0 0.0
    %691 = vmatprep.subr.mxu0 0.0
    %692 = vmatpush1.msra.mxu0 0.0
    %693 = vmatprep.subr.mxu0 0.0
    %694 = vmatpush1.msra.mxu0 0.0
    %695 = vmatprep.subr.mxu0 0.0
    %696 = vmatpush1.msra.mxu0 0.0
    %697 = vmatprep.subr.mxu0 0.0
    %698 = vmatpush1.msra.mxu0 0.0
    %699 = vmatprep.subr.mxu0 0.0
    %700 = vmatpush1.msra.mxu0 0.0
    %701 = vmatprep.subr.mxu0 0.0
    %702 = vmatpush1.msra.mxu0 0.0
    %703 = vmatprep.subr.mxu0 0.0
    %704 = vmatpush1.msra.mxu0 0.0
    %705 = vmatprep.subr.mxu0 0.0
    %706 = vmatpush1.msra.mxu0 0.0
    %707 = vmatprep.subr.mxu0 0.0
    %708 = vmatpush1.msra.mxu0 0.0
    %709 = vmatprep.subr.mxu0 0.0
    %710 = vmatpush1.msra.mxu0 0.0
    %711 = vmatprep.subr.mxu0 0.0
    %712 = vmatpush1.msra.mxu0 0.0
    %713 = vmatprep.mubr.f32.mxu0 0.0
    %v714 = vand.u32 %v493, 4294901760
    %v715 = vsub.f32 %v493, %v714
    %716 = vmatmul.mubr.f32.gmra.mrb[0].mxu0 %v715
    %v717 = vpop.f32.mrb[0].mxu0
    %v718 = vadd.f32 %v644, %v717
    %v719 = vpop.f32.mrb[0].mxu0
    %720 = vdwg.mxu0
    %721 = vmatprep.subr.mxu0 0.0
    %v722 = vand.u32 %v39, 4294901760
    %723 = vmatpush1.msra.mxu0 %v722
    %724 = vmatprep.subr.mxu0 0.0
    %725 = vmatpush1.msra.mxu0 0.0
    %726 = vmatprep.subr.mxu0 0.0
    %727 = vmatpush1.msra.mxu0 0.0
    %728 = vmatprep.subr.mxu0 0.0
    %729 = vmatpush1.msra.mxu0 0.0
    %730 = vmatprep.subr.mxu0 0.0
    %731 = vmatpush1.msra.mxu0 0.0
    %732 = vmatprep.subr.mxu0 0.0
    %733 = vmatpush1.msra.mxu0 0.0
    %734 = vmatprep.subr.mxu0 0.0
    %735 = vmatpush1.msra.mxu0 0.0
    %736 = vmatprep.subr.mxu0 0.0
    %737 = vmatpush1.msra.mxu0 0.0
    %738 = vmatprep.subr.mxu0 0.0
    %739 = vmatpush1.msra.mxu0 0.0
    %740 = vmatprep.subr.mxu0 0.0
    %741 = vmatpush1.msra.mxu0 0.0
    %742 = vmatprep.subr.mxu0 0.0
    %743 = vmatpush1.msra.mxu0 0.0
    %744 = vmatprep.subr.mxu0 0.0
    %745 = vmatpush1.msra.mxu0 0.0
    %746 = vmatprep.subr.mxu0 0.0
    %747 = vmatpush1.msra.mxu0 0.0
    %748 = vmatprep.subr.mxu0 0.0
    %749 = vmatpush1.msra.mxu0 0.0
    %750 = vmatprep.subr.mxu0 0.0
    %751 = vmatpush1.msra.mxu0 0.0
    %752 = vmatprep.subr.mxu0 0.0
    %753 = vmatpush1.msra.mxu0 0.0
    %754 = vmatprep.subr.mxu0 0.0
    %755 = vmatpush1.msra.mxu0 0.0
    %756 = vmatprep.subr.mxu0 0.0
    %757 = vmatpush1.msra.mxu0 0.0
    %758 = vmatprep.subr.mxu0 0.0
    %759 = vmatpush1.msra.mxu0 0.0
    %760 = vmatprep.subr.mxu0 0.0
    %761 = vmatpush1.msra.mxu0 0.0
    %762 = vmatprep.subr.mxu0 0.0
    %763 = vmatpush1.msra.mxu0 0.0
    %764 = vmatprep.subr.mxu0 0.0
    %765 = vmatpush1.msra.mxu0 0.0
    %766 = vmatprep.subr.mxu0 0.0
    %767 = vmatpush1.msra.mxu0 0.0
    %768 = vmatprep.subr.mxu0 0.0
    %769 = vmatpush1.msra.mxu0 0.0
    %770 = vmatprep.subr.mxu0 0.0
    %771 = vmatpush1.msra.mxu0 0.0
    %772 = vmatprep.subr.mxu0 0.0
    %773 = vmatpush1.msra.mxu0 0.0
    %774 = vmatprep.subr.mxu0 0.0
    %775 = vmatpush1.msra.mxu0 0.0
    %776 = vmatprep.subr.mxu0 0.0
    %777 = vmatpush1.msra.mxu0 0.0
    %778 = vmatprep.subr.mxu0 0.0
    %779 = vmatpush1.msra.mxu0 0.0
    %780 = vmatprep.subr.mxu0 0.0
    %781 = vmatpush1.msra.mxu0 0.0
    %782 = vmatprep.subr.mxu0 0.0
    %783 = vmatpush1.msra.mxu0 0.0
    %784 = vmatprep.subr.mxu0 0.0
    %785 = vmatpush1.msra.mxu0 0.0
    %786 = vmatprep.mubr.f32.mxu0 0.0
    %v787 = vand.u32 %v493, 4294901760
    %v788 = vsub.f32 %v493, %v787
    %v789 = vand.u32 %v788, 4294901760
    %790 = vmatmul.mubr.f32.gmra.mrb[0].mxu0 %v789
    %v791 = vpop.f32.mrb[0].mxu0
    %v792 = vadd.f32 %v718, %v791
    %v793 = vpop.f32.mrb[0].mxu0
    %794 = vdwg.mxu0
    %795 = vmatprep.subr.mxu0 0.0
    %v796 = vand.u32 %v39, 4294901760
    %v797 = vsub.f32 %v39, %v796
    %v798 = vand.u32 %v797, 4294901760
    %799 = vmatpush1.msra.mxu0 %v798
    %800 = vmatprep.subr.mxu0 0.0
    %801 = vmatpush1.msra.mxu0 0.0
    %802 = vmatprep.subr.mxu0 0.0
    %803 = vmatpush1.msra.mxu0 0.0
    %804 = vmatprep.subr.mxu0 0.0
    %805 = vmatpush1.msra.mxu0 0.0
    %806 = vmatprep.subr.mxu0 0.0
    %807 = vmatpush1.msra.mxu0 0.0
    %808 = vmatprep.subr.mxu0 0.0
    %809 = vmatpush1.msra.mxu0 0.0
    %810 = vmatprep.subr.mxu0 0.0
    %811 = vmatpush1.msra.mxu0 0.0
    %812 = vmatprep.subr.mxu0 0.0
    %813 = vmatpush1.msra.mxu0 0.0
    %814 = vmatprep.subr.mxu0 0.0
    %815 = vmatpush1.msra.mxu0 0.0
    %816 = vmatprep.subr.mxu0 0.0
    %817 = vmatpush1.msra.mxu0 0.0
    %818 = vmatprep.subr.mxu0 0.0
    %819 = vmatpush1.msra.mxu0 0.0
    %820 = vmatprep.subr.mxu0 0.0
    %821 = vmatpush1.msra.mxu0 0.0
    %822 = vmatprep.subr.mxu0 0.0
    %823 = vmatpush1.msra.mxu0 0.0
    %824 = vmatprep.subr.mxu0 0.0
    %825 = vmatpush1.msra.mxu0 0.0
    %826 = vmatprep.subr.mxu0 0.0
    %827 = vmatpush1.msra.mxu0 0.0
    %828 = vmatprep.subr.mxu0 0.0
    %829 = vmatpush1.msra.mxu0 0.0
    %830 = vmatprep.subr.mxu0 0.0
    %831 = vmatpush1.msra.mxu0 0.0
    %832 = vmatprep.subr.mxu0 0.0
    %833 = vmatpush1.msra.mxu0 0.0
    %834 = vmatprep.subr.mxu0 0.0
    %835 = vmatpush1.msra.mxu0 0.0
    %836 = vmatprep.subr.mxu0 0.0
    %837 = vmatpush1.msra.mxu0 0.0
    %838 = vmatprep.subr.mxu0 0.0
    %839 = vmatpush1.msra.mxu0 0.0
    %840 = vmatprep.subr.mxu0 0.0
    %841 = vmatpush1.msra.mxu0 0.0
    %842 = vmatprep.subr.mxu0 0.0
    %843 = vmatpush1.msra.mxu0 0.0
    %844 = vmatprep.subr.mxu0 0.0
    %845 = vmatpush1.msra.mxu0 0.0
    %846 = vmatprep.subr.mxu0 0.0
    %847 = vmatpush1.msra.mxu0 0.0
    %848 = vmatprep.subr.mxu0 0.0
    %849 = vmatpush1.msra.mxu0 0.0
    %850 = vmatprep.subr.mxu0 0.0
    %851 = vmatpush1.msra.mxu0 0.0
    %852 = vmatprep.subr.mxu0 0.0
    %853 = vmatpush1.msra.mxu0 0.0
    %854 = vmatprep.subr.mxu0 0.0
    %855 = vmatpush1.msra.mxu0 0.0
    %856 = vmatprep.subr.mxu0 0.0
    %857 = vmatpush1.msra.mxu0 0.0
    %858 = vmatprep.subr.mxu0 0.0
    %859 = vmatpush1.msra.mxu0 0.0
    %860 = vmatprep.subr.mxu0 0.0
    %861 = vmatpush1.msra.mxu0 0.0
    %862 = vmatprep.mubr.f32.mxu0 0.0
    %v863 = vand.u32 %v493, 4294901760
    %864 = vmatmul.mubr.f32.gmra.mrb[0].mxu0 %v863
    %v865 = vpop.f32.mrb[0].mxu0
    %v866 = vadd.f32 %v792, %v865
    %v867 = vpop.f32.mrb[0].mxu0
    %868 = vdwg.mxu0
    %869 = vmatprep.subr.mxu0 0.0
    %v870 = vand.u32 %v39, 4294901760
    %871 = vmatpush1.msra.mxu0 %v870
    %872 = vmatprep.subr.mxu0 0.0
    %873 = vmatpush1.msra.mxu0 0.0
    %874 = vmatprep.subr.mxu0 0.0
    %875 = vmatpush1.msra.mxu0 0.0
    %876 = vmatprep.subr.mxu0 0.0
    %877 = vmatpush1.msra.mxu0 0.0
    %878 = vmatprep.subr.mxu0 0.0
    %879 = vmatpush1.msra.mxu0 0.0
    %880 = vmatprep.subr.mxu0 0.0
    %881 = vmatpush1.msra.mxu0 0.0
    %882 = vmatprep.subr.mxu0 0.0
    %883 = vmatpush1.msra.mxu0 0.0
    %884 = vmatprep.subr.mxu0 0.0
    %885 = vmatpush1.msra.mxu0 0.0
    %886 = vmatprep.subr.mxu0 0.0
    %887 = vmatpush1.msra.mxu0 0.0
    %888 = vmatprep.subr.mxu0 0.0
    %889 = vmatpush1.msra.mxu0 0.0
    %890 = vmatprep.subr.mxu0 0.0
    %891 = vmatpush1.msra.mxu0 0.0
    %892 = vmatprep.subr.mxu0 0.0
    %893 = vmatpush1.msra.mxu0 0.0
    %894 = vmatprep.subr.mxu0 0.0
    %895 = vmatpush1.msra.mxu0 0.0
    %896 = vmatprep.subr.mxu0 0.0
    %897 = vmatpush1.msra.mxu0 0.0
    %898 = vmatprep.subr.mxu0 0.0
    %899 = vmatpush1.msra.mxu0 0.0
    %900 = vmatprep.subr.mxu0 0.0
    %901 = vmatpush1.msra.mxu0 0.0
    %902 = vmatprep.subr.mxu0 0.0
    %903 = vmatpush1.msra.mxu0 0.0
    %904 = vmatprep.subr.mxu0 0.0
    %905 = vmatpush1.msra.mxu0 0.0
    %906 = vmatprep.subr.mxu0 0.0
    %907 = vmatpush1.msra.mxu0 0.0
    %908 = vmatprep.subr.mxu0 0.0
    %909 = vmatpush1.msra.mxu0 0.0
    %910 = vmatprep.subr.mxu0 0.0
    %911 = vmatpush1.msra.mxu0 0.0
    %912 = vmatprep.subr.mxu0 0.0
    %913 = vmatpush1.msra.mxu0 0.0
    %914 = vmatprep.subr.mxu0 0.0
    %915 = vmatpush1.msra.mxu0 0.0
    %916 = vmatprep.subr.mxu0 0.0
    %917 = vmatpush1.msra.mxu0 0.0
    %918 = vmatprep.subr.mxu0 0.0
    %919 = vmatpush1.msra.mxu0 0.0
    %920 = vmatprep.subr.mxu0 0.0
    %921 = vmatpush1.msra.mxu0 0.0
    %922 = vmatprep.subr.mxu0 0.0
    %923 = vmatpush1.msra.mxu0 0.0
    %924 = vmatprep.subr.mxu0 0.0
    %925 = vmatpush1.msra.mxu0 0.0
    %926 = vmatprep.subr.mxu0 0.0
    %927 = vmatpush1.msra.mxu0 0.0
    %928 = vmatprep.subr.mxu0 0.0
    %929 = vmatpush1.msra.mxu0 0.0
    %930 = vmatprep.subr.mxu0 0.0
    %931 = vmatpush1.msra.mxu0 0.0
    %932 = vmatprep.subr.mxu0 0.0
    %933 = vmatpush1.msra.mxu0 0.0
    %934 = vmatprep.mubr.f32.mxu0 0.0
    %v935 = vand.u32 %v493, 4294901760
    %936 = vmatmul.mubr.f32.gmra.mrb[0].mxu0 %v935
    %v937 = vpop.f32.mrb[0].mxu0
    %v938 = vadd.f32 %v866, %v937
    %v939 = vpop.f32.mrb[0].mxu0
    %940 = vdwg.mxu0
    %v941 = vadd.f32 %v40, %v489
    %v942 = vadd.f32 %v41, %v938
    %vm943 = vcmask 253952
    %944 = vst.msk [vmem:[#allocation6] sm:$0x1] %vm943, %v941
    %945 = vst.msk [vmem:[#allocation6 + $0x1] sm:$0x1] %vm943, %v942
    %v946 = vld [vmem:[#allocation2] sm:$0x1]
    %v947 = vld [vmem:[#allocation2 + $0x1] sm:$0x1]
    %vm948 = vcmask 57344
    %v949 = vsel %vm948, %v36, 0.0
    %950 = vadd.xlane.f32.xlu0 %v949
    %v951 = vpop.xlane.xlu0 %950
    %v952 = vsel %vm948, %v37, 0.0
    %953 = vadd.xlane.f32.xlu0 %v952
    %v954 = vpop.xlane.xlu0 %953
    %v955 = vadd.f32 %v946, %v951
    %v956 = vadd.f32 %v947, %v954
    %vm957 = vcmask 0
    %958 = vst.msk [vmem:[#allocation2] sm:$0x1] %vm957, %v955
    %959 = vst.msk [vmem:[#allocation2 + $0x1] sm:$0x1] %vm957, %v956
    // Predicated region
    $region18: #{tpu_custom_call.1} parent=1 // pred_check
      %p960 = pneg %p26
    $region19: #{tpu_custom_call.1} parent=1 // pred_check_branch
      %962 = sbr.rel (%p960) target = $region21
    $region20: #{tpu_custom_call.1} parent=1 // pred_region
      %v963 = vld [vmem:[#allocation2] sm:$0x1]
      %v964 = vld [vmem:[#allocation2 + $0x1] sm:$0x1]
      %v965 = vmax.f32 %v963, 1e-09
      %v966 = vmax.f32 %v964, 1e-09
      %v967 = vld [vmem:[#allocation6] sm:$0x1]
      %v968 = vld [vmem:[#allocation6 + $0x1] sm:$0x1]
      %970 = vset.pattern.permute.xlu0 0
      %971 = vperm.xlu0 %970, %v965
      %v972 = vpop.permute.xlu0 %971
      %v974 = vlaneseq
      %v975 = vshrl.u32 %v974, 7
      %v976 = vsub.s32 0, %v975
      %v977 = vrot.slane %v972, %v976
      %979 = vset.pattern.permute.xlu0 0
      %980 = vperm.xlu0 %979, %v966
      %v981 = vpop.permute.xlu0 %980
      %v983 = vlaneseq
      %v984 = vshrl.u32 %v983, 7
      %v985 = vsub.s32 0, %v984
      %v986 = vrot.slane %v981, %v985
      %v987 = vrcp.pop %v977
      %v988 = vmul.f32 %v967, %v987
      %v989 = vrcp.pop %v986
      %v990 = vmul.f32 %v968, %v989
      %991 = vst.msk [vmem:[#allocation6] sm:$0x1] %vm943, %v988
      %992 = vst.msk [vmem:[#allocation6 + $0x1] sm:$0x1] %vm943, %v990
    $region21: #{tpu_custom_call.1} parent=1 // pred_fallthru
      _
    // Predicated region
    $region22: #{tpu_custom_call.1} parent=1 // pred_check
      _
    $region23: #{tpu_custom_call.1} parent=1 // pred_check_branch
      %994 = sbr.rel (0) target = $region25
    $region24: #{tpu_custom_call.1} parent=1 // pred_region
      %s996 = ssub.s32 32, 32
      %997 = vsyncadd [#allocation5], %s996
      %s998 = sshll.u32 [#allocation6], 4
      %s999 = int_to_ptr.vmem [resolvable:$true] %s998
      %1004 = dma.vmem_to_hbm [thread:$0]  %s999, 32, %s2, [#allocation5], 16, 16, 1
    $region25: #{tpu_custom_call.1} parent=1 // pred_fallthru
      _
    // Predicated region
    $region26: #{tpu_custom_call.1} parent=1 // pred_check
      _
    $region27: #{tpu_custom_call.1} parent=1 // pred_check_branch
      %1006 = sbr.rel (0) target = $region29
    $region28: #{tpu_custom_call.1} parent=1 // pred_region
      %1007 = dma.done [#allocation5], 32
    $region29: #{tpu_custom_call.1} parent=1 // pred_fallthru
      _
    %1008 = vsyncpa [#allocation4], 1
    %1009 = vsyncpa [#allocation5], 1

</llo_original>
